<compile_context>
chip_gen: v7x
topology: tpu7x:2x2x1
jax: 0.10.0
libtpu: 0.0.40
codegen_flags: <defaults>
</compile_context>

<pallas_src>
import jax
import jax.numpy as jnp
import numpy as np
from jax.experimental import pallas as pl
from jax.experimental.pallas import tpu as pltpu


# ----------------------------------------------------------------------------
# Pallas kernel: one (batch, pixel-tile) block of the LSeg similarity head
# ----------------------------------------------------------------------------
def _lseg_score_kernel(img_ref, wt_ref, b_ref, txt_ref, out_ref):
    # img_ref: (1, Cin, THW) bf16  channels-major pixel tile
    # wt_ref:  (C, Cin)      bf16  projection weight (pre-transposed)
    # b_ref:   (C, 1)        f32   projection bias
    # txt_ref: (1, K, C)     bf16  text embeddings, pre-L2-normalized * logit_scale
    # out_ref: (1, K, THW)   f32   per-pixel class scores (lane-dense along THW)
    x = img_ref[0].astype(jnp.float32)                 # (Cin, THW)
    wt = wt_ref[...].astype(jnp.float32)               # (C, Cin)
    cin = x.shape[0]

    # 1x1-conv projection -> feat : (C, THW)
    if cin >= 128:
        feat = jnp.dot(wt, x, preferred_element_type=jnp.float32)
        feat = feat + b_ref[...]
    else:
        # Tiny contraction dim (RGB): keep it on the VPU as `cin` broadcast
        # multiply-adds instead of a padded, ~2%-utilized MXU matmul.
        feat = b_ref[...] + wt[:, 0:1] * x[0:1, :]     # (C, THW)
        for c in range(1, cin):
            feat = feat + wt[:, c:c + 1] * x[c:c + 1, :]

    # Per-pixel L2 norm factored out of the similarity matmul:
    #   t_norm @ (feat / ||feat||)  ==  (t_norm @ feat) * (1 / ||feat||)
    # (F.normalize divides by clamp(norm, eps); rsqrt(sum^2 + eps) only
    #  differs for near-zero feature vectors.)
    inv_nrm = jax.lax.rsqrt(
        jnp.sum(feat * feat, axis=0, keepdims=True) + 1e-12)     # (1, THW)

    t = txt_ref[0]                                     # (K, C), normed * scale
    logits = jnp.dot(t, feat.astype(jnp.bfloat16),
                     preferred_element_type=jnp.float32)         # (K, THW)
    out_ref[0] = logits * inv_nrm


def _pick_hw_tile(hw):
    """Largest multiple of 128 (<= 8192) that evenly divides hw, else full hw.

    8192 pixels/tile keeps (bf16 pixel tile + f32 feature scratch + output
    tile) x double-buffering well under the 32 MiB scoped-VMEM default and
    leaves headroom on v7x's 64 MiB physical VMEM.
    """
    for cand in (8192, 4096, 2048, 1024, 512, 256, 128):
        if hw % cand == 0:
            return cand
    return hw


def lseg_score_map(img_nchw, txt_emb, proj_w, proj_b, logit_scale):
    """img_nchw: (B, Cin, H, W); txt_emb: (B, K, C); returns (B, K, H, W) f32."""
    B, Cin, H, W = img_nchw.shape
    _, K, C = txt_emb.shape
    HW = H * W
    thw = _pick_hw_tile(HW)

    # Channels-major layout: a pure reshape of NCHW (no transpose, no extra
    # HBM pass). bf16 halves the pixel-stream HBM/VMEM traffic.
    pix = img_nchw.reshape(B, Cin, HW).astype(jnp.bfloat16)

    # Hoisted out of the kernel: L2-normalize the text embeddings once and
    # fold logit_scale into them (so the kernel's final multiply is only the
    # per-pixel norm correction).
    t = txt_emb.astype(jnp.float32)
    t = t * jax.lax.rsqrt(jnp.sum(t * t, axis=-1, keepdims=True) + 1e-12)
    t = (t * logit_scale.astype(jnp.float32)).astype(jnp.bfloat16)

    w_t = proj_w.astype(jnp.bfloat16).T                # (C, Cin)
    bias = proj_b.astype(jnp.float32).reshape(C, 1)    # (C, 1)

    out = pl.pallas_call(
        _lseg_score_kernel,
        out_shape=jax.ShapeDtypeStruct((B, K, HW), jnp.float32),
        grid=(B, HW // thw),
        in_specs=[
            pl.BlockSpec((1, Cin, thw), lambda b, i: (b, 0, i)),
            pl.BlockSpec((C, Cin), lambda b, i: (0, 0)),
            pl.BlockSpec((C, 1), lambda b, i: (0, 0)),
            pl.BlockSpec((1, K, C), lambda b, i: (b, 0, 0)),
        ],
        out_specs=pl.BlockSpec((1, K, thw), lambda b, i: (b, 0, i)),
        compiler_params=pltpu.CompilerParams(
            dimension_semantics=("parallel", "parallel"),
            vmem_limit_bytes=32 * 1024 * 1024),
    )(pix, w_t, bias, t)

    # Lane-dense (B, K, HW) reshapes straight to (B, K, H, W): no transpose.
    return out.reshape(B, K, H, W)


# ----------------------------------------------------------------------------
# Glue: synthetic deterministic parameters + simple text "encoder"
# ----------------------------------------------------------------------------
# TODO(synk): the full CLIP-ViT image backbone and CLIP text transformer of
# LSeg are replaced by a 1x1-conv projection and an embedding-lookup text
# encoder (no checkpoint is loaded); only the pixel/text similarity head is
# exact and runs in the Pallas kernel.
def make_params(key, cin=3, feat_dim=32, vocab=64):
    k1, k2, k3, k4, k5 = jax.random.split(key, 5)
    return {
        "proj_w": jax.random.normal(k1, (cin, feat_dim), jnp.float32) * 0.1,
        "proj_b": jax.random.normal(k2, (feat_dim,), jnp.float32) * 0.01,
        "tok_emb": jax.random.normal(k3, (vocab, feat_dim), jnp.float32) * 0.1,
        "txt_proj": jax.random.normal(k4, (feat_dim, feat_dim), jnp.float32) * 0.1,
        "others_emb": jax.random.normal(k5, (feat_dim,), jnp.float32) * 0.1,
        "logit_scale": jnp.asarray(10.0, jnp.float32),
    }


def encode_text(params, txt_tokens):
    """txt_tokens: (B, L) int32 -> (B, 2, C) embeddings for ['others', name]."""
    tok = params["tok_emb"][txt_tokens]                 # (B, L, C)
    name_emb = tok.mean(axis=1) @ params["txt_proj"]    # (B, C)
    others = jnp.broadcast_to(params["others_emb"][None, :], name_emb.shape)
    return jnp.stack([others, name_emb], axis=1)        # (B, 2, C)


@jax.jit
def text_driven_segmentation(params, img, txt_tokens):
    txt_emb = encode_text(params, txt_tokens)
    return lseg_score_map(img, txt_emb, params["proj_w"], params["proj_b"],
                          params["logit_scale"])


def _reference_score_map(params, img, txt_tokens):
    """Plain-JAX f32 reference of the same forward (for a sanity check)."""
    txt = encode_text(params, txt_tokens)
    t = txt * jax.lax.rsqrt(jnp.sum(txt * txt, axis=-1, keepdims=True) + 1e-12)
    feat = jnp.einsum("bchw,cd->bdhw", img, params["proj_w"])
    feat = feat + params["proj_b"][None, :, None, None]
    feat = feat * jax.lax.rsqrt(
        jnp.sum(feat * feat, axis=1, keepdims=True) + 1e-12)
    return jnp.einsum("bkd,bdhw->bkhw", t, feat) * params["logit_scale"]


if __name__ == "__main__":
    key = jax.random.PRNGKey(0)
    k_img, k_txt, k_par = jax.random.split(key, 3)

    B, Cin, H, W = 2, 3, 16, 16
    L, vocab, C = 8, 64, 32

    img = jax.random.normal(k_img, (B, Cin, H, W), jnp.float32)
    txt_tokens = jax.random.randint(k_txt, (B, L), 0, vocab, jnp.int32)
    params = make_params(k_par, cin=Cin, feat_dim=C, vocab=vocab)

    score_map = text_driven_segmentation(params, img, txt_tokens)
    score_map = jax.block_until_ready(score_map)
    assert score_map.shape == (B, 2, H, W)
    assert bool(jnp.all(jnp.isfinite(score_map)))

    ref = _reference_score_map(params, img, txt_tokens)
    np.testing.assert_allclose(np.asarray(score_map), np.asarray(ref),
                               atol=5e-1, rtol=5e-2)
    print("KERNEL_OK")
</pallas_src>

<mosaic_0001>
module attributes {stable_mosaic.version = 11 : i64} {
  func.func @_lseg_score_kernel(%arg0: i32, %arg1: i32, %arg2: memref<1x3x256xbf16, #tpu.memory_space<vmem>>, %arg3: memref<32x3xbf16, #tpu.memory_space<vmem>>, %arg4: memref<32x1xf32, #tpu.memory_space<vmem>>, %arg5: memref<1x2x32xbf16, #tpu.memory_space<vmem>>, %arg6: memref<1x2x256xf32, #tpu.memory_space<vmem>>) attributes {dimension_semantics = [#tpu.dimension_semantics<parallel>, #tpu.dimension_semantics<parallel>], iteration_bounds = array<i64: 2, 1>, scalar_prefetch = 0 : i64, scratch_operands = 0 : i64, tpu.core_type = #tpu.core_type<tc>, window_params = [{transform_indices = @transform_0, window_bounds = array<i64: 1, 3, 256>}, {pipeline_mode = #tpu.pipeline_mode<synchronous>, transform_indices = @transform_1, window_bounds = array<i64: 32, 3>}, {pipeline_mode = #tpu.pipeline_mode<synchronous>, transform_indices = @transform_2, window_bounds = array<i64: 32, 1>}, {transform_indices = @transform_3, window_bounds = array<i64: 1, 2, 32>}, {transform_indices = @transform_4, window_bounds = array<i64: 1, 2, 256>}]} {
    %c0 = arith.constant 0 : index
    %c0_0 = arith.constant 0 : index
    %c0_1 = arith.constant 0 : index
    %0 = vector.load %arg2[%c0, %c0_0, %c0_1] : memref<1x3x256xbf16, #tpu.memory_space<vmem>>, vector<1x3x256xbf16>
    %1 = vector.shape_cast %0 : vector<1x3x256xbf16> to vector<3x256xbf16>
    %2 = arith.extf %1 : vector<3x256xbf16> to vector<3x256xf32>
    %c0_2 = arith.constant 0 : index
    %c0_3 = arith.constant 0 : index
    %3 = vector.load %arg3[%c0_2, %c0_3] : memref<32x3xbf16, #tpu.memory_space<vmem>>, vector<32x3xbf16>
    %4 = arith.extf %3 : vector<32x3xbf16> to vector<32x3xf32>
    %c0_4 = arith.constant 0 : index
    %c0_5 = arith.constant 0 : index
    %5 = vector.load %arg4[%c0_4, %c0_5] : memref<32x1xf32, #tpu.memory_space<vmem>>, vector<32x1xf32>
    %6 = vector.extract_strided_slice %4 {offsets = [0, 0], sizes = [32, 1], strides = [1, 1]} : vector<32x3xf32> to vector<32x1xf32>
    %7 = vector.extract_strided_slice %2 {offsets = [0, 0], sizes = [1, 256], strides = [1, 1]} : vector<3x256xf32> to vector<1x256xf32>
    %8 = vector.broadcast %6 : vector<32x1xf32> to vector<32x256xf32>
    %9 = vector.broadcast %7 : vector<1x256xf32> to vector<32x256xf32>
    %10 = arith.mulf %8, %9 : vector<32x256xf32>
    %11 = vector.broadcast %5 : vector<32x1xf32> to vector<32x256xf32>
    %12 = arith.addf %11, %10 : vector<32x256xf32>
    %13 = vector.extract_strided_slice %4 {offsets = [0, 1], sizes = [32, 1], strides = [1, 1]} : vector<32x3xf32> to vector<32x1xf32>
    %14 = vector.extract_strided_slice %2 {offsets = [1, 0], sizes = [1, 256], strides = [1, 1]} : vector<3x256xf32> to vector<1x256xf32>
    %15 = vector.broadcast %13 : vector<32x1xf32> to vector<32x256xf32>
    %16 = vector.broadcast %14 : vector<1x256xf32> to vector<32x256xf32>
    %17 = arith.mulf %15, %16 : vector<32x256xf32>
    %18 = arith.addf %12, %17 : vector<32x256xf32>
    %19 = vector.extract_strided_slice %4 {offsets = [0, 2], sizes = [32, 1], strides = [1, 1]} : vector<32x3xf32> to vector<32x1xf32>
    %20 = vector.extract_strided_slice %2 {offsets = [2, 0], sizes = [1, 256], strides = [1, 1]} : vector<3x256xf32> to vector<1x256xf32>
    %21 = vector.broadcast %19 : vector<32x1xf32> to vector<32x256xf32>
    %22 = vector.broadcast %20 : vector<1x256xf32> to vector<32x256xf32>
    %23 = arith.mulf %21, %22 : vector<32x256xf32>
    %24 = arith.addf %18, %23 : vector<32x256xf32>
    %25 = arith.mulf %24, %24 : vector<32x256xf32>
    %cst = arith.constant dense<0.000000e+00> : vector<256xf32>
    %26 = vector.multi_reduction <add>, %25, %cst [0] : vector<32x256xf32> to vector<256xf32>
    %27 = vector.shape_cast %26 : vector<256xf32> to vector<1x256xf32>
    %cst_6 = arith.constant 9.99999996E-13 : f32
    %28 = vector.broadcast %cst_6 : f32 to vector<1x256xf32>
    %29 = arith.addf %27, %28 : vector<1x256xf32>
    %30 = math.rsqrt %29 : vector<1x256xf32>
    %c0_7 = arith.constant 0 : index
    %c0_8 = arith.constant 0 : index
    %c0_9 = arith.constant 0 : index
    %31 = vector.load %arg5[%c0_7, %c0_8, %c0_9] : memref<1x2x32xbf16, #tpu.memory_space<vmem>>, vector<1x2x32xbf16>
    %32 = vector.shape_cast %31 : vector<1x2x32xbf16> to vector<2x32xbf16>
    %33 = arith.truncf %24 : vector<32x256xf32> to vector<32x256xbf16>
    %cst_10 = arith.constant dense<0.000000e+00> : vector<2x256xf32>
    %34 = tpu.matmul %32, %33, %cst_10 {dimension_numbers = #tpu.dot_dimension_numbers<[1], [0], [0], [1], [0, 0, 1, 1], [], []>} : vector<2x32xbf16>, vector<32x256xbf16>, vector<2x256xf32> -> vector<2x256xf32>
    %35 = vector.broadcast %30 : vector<1x256xf32> to vector<2x256xf32>
    %36 = arith.mulf %34, %35 : vector<2x256xf32>
    %c0_11 = arith.constant 0 : index
    %c0_12 = arith.constant 0 : index
    %c0_13 = arith.constant 0 : index
    %37 = vector.load %arg6[%c0_11, %c0_12, %c0_13] : memref<1x2x256xf32, #tpu.memory_space<vmem>>, vector<1x2x256xf32>
    %38 = vector.shape_cast %37 : vector<1x2x256xf32> to vector<2x256xf32>
    %39 = vector.shape_cast %36 : vector<2x256xf32> to vector<1x2x256xf32>
    tpu.vector_store %arg6[%c0_11, %c0_12, %c0_13], %39 {strides = array<i32>} : memref<1x2x256xf32, #tpu.memory_space<vmem>>, vector<1x2x256xf32>,
    return
  }
  func.func @transform_0(%arg0: i32, %arg1: i32) -> (i32, i32, i32) {
    %c0_i32 = arith.constant 0 : i32
    %c0_i32_0 = arith.constant 0 : i32
    return %arg0, %c0_i32, %arg1 : i32, i32, i32
  }
  func.func @transform_1(%arg0: i32, %arg1: i32) -> (i32, i32) {
    %c0_i32 = arith.constant 0 : i32
    %c0_i32_0 = arith.constant 0 : i32
    %c0_i32_1 = arith.constant 0 : i32
    return %c0_i32, %c0_i32_0 : i32, i32
  }
  func.func @transform_2(%arg0: i32, %arg1: i32) -> (i32, i32) {
    %c0_i32 = arith.constant 0 : i32
    %c0_i32_0 = arith.constant 0 : i32
    %c0_i32_1 = arith.constant 0 : i32
    return %c0_i32, %c0_i32_0 : i32, i32
  }
  func.func @transform_3(%arg0: i32, %arg1: i32) -> (i32, i32, i32) {
    %c0_i32 = arith.constant 0 : i32
    %c0_i32_0 = arith.constant 0 : i32
    %c0_i32_1 = arith.constant 0 : i32
    return %arg0, %c0_i32, %c0_i32_0 : i32, i32, i32
  }
  func.func @transform_4(%arg0: i32, %arg1: i32) -> (i32, i32, i32) {
    %c0_i32 = arith.constant 0 : i32
    %c0_i32_0 = arith.constant 0 : i32
    return %arg0, %c0_i32, %arg1 : i32, i32, i32
  }
}

</mosaic_0001>

<llo_original>
// kernel: text_driven_segmentation.1
$region0: #{text_driven_segmentation.1}
  #allocation0 [shape = 'u32[]', space=smem, size = 0x4, offset = 0x4, fixed_abs, tag = 'smem constant byte address 0x4 - core index']
  #allocation1 [shape = 'u32[144,128]{1,0:T(1,128)}', space=vmem, size = 0x12000, scoped, tag = 'internal scratch']
  %s0 = inlined_call_operand.vmem [shape: bf16[2,3,256], index: 0, kind: input, shape index: {}]
  %s1 = inlined_call_operand.vmem [shape: bf16[32,3], index: 1, kind: input, shape index: {}]
  %s2 = inlined_call_operand.vmem [shape: f32[32,1], index: 2, kind: input, shape index: {}]
  %s3 = inlined_call_operand.vmem [shape: bf16[2,2,32], index: 3, kind: input, shape index: {}]
  %s4 = inlined_call_operand.vmem [shape: f32[2,2,256], index: 4, kind: output, shape index: {}]
  %s5 = sld [smem:[#allocation0]]
  $region49: #{text_driven_segmentation.1} parent=0
    _
  %s7 = ssub.s32 1, %s5
  %s8 = scalar_select 0, %s7, %s5
  loop: start=0, step=1, limit=4
  $region2: #{text_driven_segmentation.1} parent=0 // loop_pre_header
    _
  $region3: #{text_driven_segmentation.1} parent=0 // loop_header
    %s10 = sphi 0, %s14
    %p11 = scmp.ge.s32.totalorder %s10, 4
    %s17 = sphi 0, %s29
    %s18 = sphi 0, %s25
    %s19 = sphi 0, %s17
    %s20 = sphi 0, %s18
    %s21 = sphi 0, %s19
    %s22 = sphi 0, %s20
    %s34 = sphi 0, %s36
    %s37 = sphi 0, %s34
    %s38 = sphi 0, %s37
    %s54 = sphi 0, %s38
    %s58 = sphi 0, %s58
    %s60 = sphi 0, %s58
    %s61 = sphi 0, %s60
    %s75 = sphi 0, %s61
    %s79 = sphi 0, %s79
    %s81 = sphi 0, %s79
    %s82 = sphi 0, %s81
    %s96 = sphi 0, %s82
    %s102 = sphi 0, %s104
    %s105 = sphi 0, %s102
    %s106 = sphi 0, %s105
    %s122 = sphi 0, %s106
    %s130 = sphi 0, %s132
    %s133 = sphi 0, %s130
    %s134 = sphi 0, %s133
    %s150 = sphi 0, %s134
  $region4: #{text_driven_segmentation.1} parent=0 // loop_header_branch
    %13 = sbr.rel (%p11) target = $region8
  $region5: #{text_driven_segmentation.1} parent=0 // loop_body
    %s15 = ssub.s32 %s10, 1
    %s16 = ssub.s32 %s10, 2
    %s23 = sadd.s32 1, %s18
    %p24 = scmp.ge.s32.totalorder %s23, 1
    %s25 = scalar_select %p24, 0, %s23
    %s26 = sadd.s32 1, %s17
    %s27 = scalar_select %p24, %s26, %s17
    %p28 = scmp.ge.s32.totalorder %s27, 2
    %s29 = scalar_select %p28, 0, %s27
    %s30 = ssub.s32 %s17, %s29
    %s31 = ssub.s32 %s18, %s25
    %s32 = sor.u32 %s30, %s31
    %p33 = scmp.eq.s32.totalorder %s32, 0
    %s35 = sadd.s32 %s34, 1
    %s36 = scalar_select %p33, %s34, %s35
    %p39 = pneg %p33
    %p40 = scmp.eq.s32.totalorder %s10, 1
    %p41 = por %p39, %p40
    %p42 = scmp.ne.s32.totalorder %s34, %s37
    %p43 = scmp.eq.s32.totalorder %s10, 0
    %p44 = por %p42, %p43
    %p45 = scmp.ne.s32.totalorder %s34, %s37
    %p46 = scmp.eq.s32.totalorder %s15, 1
    %p47 = por %p45, %p46
    %p48 = scmp.ne.s32.totalorder %s37, %s38
    %p49 = scmp.eq.s32.totalorder %s15, 0
    %p50 = por %p48, %p49
    %p51 = scmp.ne.s32.totalorder %s37, %s38
    %p52 = scmp.eq.s32.totalorder %s16, 1
    %p53 = por %p51, %p52
    %p55 = scmp.ne.s32.totalorder %s38, %s54
    %p56 = scmp.eq.s32.totalorder %s16, 0
    %p57 = por %p55, %p56
    %s59 = sadd.s32 %s58, 1
    %p62 = scmp.eq.s32.totalorder %s10, 1
    %p63 = scmp.ne.s32.totalorder %s58, %s60
    %p64 = scmp.eq.s32.totalorder %s10, 0
    %p65 = por %p63, %p64
    %p66 = scmp.ne.s32.totalorder %s58, %s60
    %p67 = scmp.eq.s32.totalorder %s15, 1
    %p68 = por %p66, %p67
    %p69 = scmp.ne.s32.totalorder %s60, %s61
    %p70 = scmp.eq.s32.totalorder %s15, 0
    %p71 = por %p69, %p70
    %p72 = scmp.ne.s32.totalorder %s60, %s61
    %p73 = scmp.eq.s32.totalorder %s16, 1
    %p74 = por %p72, %p73
    %p76 = scmp.ne.s32.totalorder %s61, %s75
    %p77 = scmp.eq.s32.totalorder %s16, 0
    %p78 = por %p76, %p77
    %s80 = sadd.s32 %s79, 1
    %p83 = scmp.eq.s32.totalorder %s10, 1
    %p84 = scmp.ne.s32.totalorder %s79, %s81
    %p85 = scmp.eq.s32.totalorder %s10, 0
    %p86 = por %p84, %p85
    %p87 = scmp.ne.s32.totalorder %s79, %s81
    %p88 = scmp.eq.s32.totalorder %s15, 1
    %p89 = por %p87, %p88
    %p90 = scmp.ne.s32.totalorder %s81, %s82
    %p91 = scmp.eq.s32.totalorder %s15, 0
    %p92 = por %p90, %p91
    %p93 = scmp.ne.s32.totalorder %s81, %s82
    %p94 = scmp.eq.s32.totalorder %s16, 1
    %p95 = por %p93, %p94
    %p97 = scmp.ne.s32.totalorder %s82, %s96
    %p98 = scmp.eq.s32.totalorder %s16, 0
    %p99 = por %p97, %p98
    %s100 = ssub.s32 %s17, %s29
    %p101 = scmp.eq.s32.totalorder %s100, 0
    %s103 = sadd.s32 %s102, 1
    %s104 = scalar_select %p101, %s102, %s103
    %p107 = pneg %p101
    %p108 = scmp.eq.s32.totalorder %s10, 1
    %p109 = por %p107, %p108
    %p110 = scmp.ne.s32.totalorder %s102, %s105
    %p111 = scmp.eq.s32.totalorder %s10, 0
    %p112 = por %p110, %p111
    %p113 = scmp.ne.s32.totalorder %s102, %s105
    %p114 = scmp.eq.s32.totalorder %s15, 1
    %p115 = por %p113, %p114
    %p116 = scmp.ne.s32.totalorder %s105, %s106
    %p117 = scmp.eq.s32.totalorder %s15, 0
    %p118 = por %p116, %p117
    %p119 = scmp.ne.s32.totalorder %s105, %s106
    %p120 = scmp.eq.s32.totalorder %s16, 1
    %p121 = por %p119, %p120
    %p123 = scmp.ne.s32.totalorder %s106, %s122
    %p124 = scmp.eq.s32.totalorder %s16, 0
    %p125 = por %p123, %p124
    %s126 = ssub.s32 %s17, %s29
    %s127 = ssub.s32 %s18, %s25
    %s128 = sor.u32 %s126, %s127
    %p129 = scmp.eq.s32.totalorder %s128, 0
    %s131 = sadd.s32 %s130, 1
    %s132 = scalar_select %p129, %s130, %s131
    %p135 = pneg %p129
    %p136 = scmp.eq.s32.totalorder %s10, 1
    %p137 = por %p135, %p136
    %p138 = scmp.ne.s32.totalorder %s130, %s133
    %p139 = scmp.eq.s32.totalorder %s10, 0
    %p140 = por %p138, %p139
    %p141 = scmp.ne.s32.totalorder %s130, %s133
    %p142 = scmp.eq.s32.totalorder %s15, 1
    %p143 = por %p141, %p142
    %p144 = scmp.ne.s32.totalorder %s133, %s134
    %p145 = scmp.eq.s32.totalorder %s15, 0
    %p146 = por %p144, %p145
    %p147 = scmp.ne.s32.totalorder %s133, %s134
    %p148 = scmp.eq.s32.totalorder %s16, 1
    %p149 = por %p147, %p148
    %p151 = scmp.ne.s32.totalorder %s134, %s150
    %p152 = scmp.eq.s32.totalorder %s16, 0
    %p153 = por %p151, %p152
    %p154 = scmp.le.s32.totalorder 1, %s10
    %p155 = scmp.lt.s32.totalorder %s10, 3
    %p156 = pnand %p154, %p155
    %p157 = pneg %p156
    // Predicated region
    $region9: #{text_driven_segmentation.1} parent=5 // pred_check
      _
    $region10: #{text_driven_segmentation.1} parent=5 // pred_check_branch
      %159 = sbr.rel (%p156) target = $region12
    $region11: #{text_driven_segmentation.1} parent=5 // pred_region
      %s160 = ssub.s32 %s10, 1
      // Predicated region
      $region13: #{text_driven_segmentation.1} parent=11 // pred_check
        %p161 = pneg %p71
      $region14: #{text_driven_segmentation.1} parent=11 // pred_check_branch
        %163 = sbr.rel (%p161) target = $region16
      $region15: #{text_driven_segmentation.1} parent=11 // pred_region
        _
      $region16: #{text_driven_segmentation.1} parent=11 // pred_fallthru
        _
      // Predicated region
      $region17: #{text_driven_segmentation.1} parent=11 // pred_check
        %p164 = pneg %p92
      $region18: #{text_driven_segmentation.1} parent=11 // pred_check_branch
        %166 = sbr.rel (%p164) target = $region20
      $region19: #{text_driven_segmentation.1} parent=11 // pred_region
        _
      $region20: #{text_driven_segmentation.1} parent=11 // pred_fallthru
        _
    $region12: #{text_driven_segmentation.1} parent=5 // pred_fallthru
      _
    %p167 = scmp.lt.s32.totalorder %s10, 2
    // Predicated region
    $region21: #{text_driven_segmentation.1} parent=5 // pred_check
      %p168 = pneg %p167
    $region22: #{text_driven_segmentation.1} parent=5 // pred_check_branch
      %170 = sbr.rel (%p168) target = $region24
    $region23: #{text_driven_segmentation.1} parent=5 // pred_region
      // Predicated region
      $region25: #{text_driven_segmentation.1} parent=23 // pred_check
        %p171 = pneg %p44
      $region26: #{text_driven_segmentation.1} parent=23 // pred_check_branch
        %173 = sbr.rel (%p171) target = $region28
      $region27: #{text_driven_segmentation.1} parent=23 // pred_region
        %s174 = smul.u32 2, %s18
        %p175 = scmp.lt.s32.totalorder %s17, 1
        %s176 = scalar_select %p175, %s17, 1
        %p177 = scmp.lt.s32.totalorder %s174, 1
        %s178 = scalar_select %p177, %s174, 1
        %s179 = smul.addr %s176, 2
        %s180 = sadd.s32 %s178, %s179
        %s181 = smul.addr %s180, 2
        %s182 = scalar_lea.vmem %s0, %s181
        %s183 = smul.u32 2, %s18
      $region28: #{text_driven_segmentation.1} parent=23 // pred_fallthru
        _
      // Predicated region
      $region29: #{text_driven_segmentation.1} parent=23 // pred_check
        %p184 = pneg %p112
      $region30: #{text_driven_segmentation.1} parent=23 // pred_check_branch
        %186 = sbr.rel (%p184) target = $region32
      $region31: #{text_driven_segmentation.1} parent=23 // pred_region
        %p187 = scmp.lt.s32.totalorder %s17, 1
        %s188 = scalar_select %p187, %s17, 1
        %s189 = scalar_lea.vmem %s3, %s188
      $region32: #{text_driven_segmentation.1} parent=23 // pred_fallthru
        _
    $region24: #{text_driven_segmentation.1} parent=5 // pred_fallthru
      _
    %p190 = scmp.le.s32.totalorder 1, %s10
    %p191 = scmp.lt.s32.totalorder %s10, 3
    %p192 = pnand %p190, %p191
    %p193 = pneg %p192
    // Predicated region
    $region33: #{text_driven_segmentation.1} parent=5 // pred_check
      _
    $region34: #{text_driven_segmentation.1} parent=5 // pred_check_branch
      %195 = sbr.rel (%p192) target = $region36
    $region35: #{text_driven_segmentation.1} parent=5 // pred_region
      %s196 = ssub.s32 %s10, 1
      %s197 = smul.u32 2, %s20
      %p198 = scmp.lt.s32.totalorder %s19, 1
      %s199 = scalar_select %p198, %s19, 1
      %p200 = scmp.lt.s32.totalorder %s197, 1
      %s201 = scalar_select %p200, %s197, 1
      %s202 = smul.addr %s199, 2
      %s203 = sadd.s32 %s201, %s202
      %s204 = smul.addr %s203, 2
      %s205 = scalar_lea.vmem %s0, %s204
      %p206 = pneg %p50
      %p207 = pneg %p47
      %p208 = pneg %p71
      %p209 = pneg %p68
      %p210 = pneg %p92
      %p211 = pneg %p89
      %p212 = scmp.lt.s32.totalorder %s19, 1
      %s213 = scalar_select %p212, %s19, 1
      %s214 = scalar_lea.vmem %s3, %s213
      %p215 = pneg %p118
      %p216 = pneg %p115
      %p217 = pneg %p146
      %p218 = pneg %p143
      %s219 = smul.u32 2, %s20
      %p220 = scmp.lt.s32.totalorder %s19, 1
      %s221 = scalar_select %p220, %s19, 1
      %p222 = scmp.lt.s32.totalorder %s219, 1
      %s223 = scalar_select %p222, %s219, 1
      %s224 = smul.addr %s221, 2
      %s225 = sadd.s32 %s223, %s224
      %s226 = smul.addr %s225, 2
      %s227 = scalar_lea.vmem %s4, %s226
      %s228 = smul.u32 2, %s20
      %p229 = scmp.lt.s32.totalorder %s19, 1
      %s230 = scalar_select %p229, %s19, 1
      %p231 = scmp.lt.s32.totalorder %s228, 1
      %s232 = scalar_select %p231, %s228, 1
      %s233 = smul.addr %s230, 2
      %s234 = sadd.s32 %s232, %s233
      %s235 = smul.addr %s234, 2
      %s236 = scalar_lea.vmem %s0, %s235
      %s237 = smul.u32 2, %s20
      %p238 = scmp.lt.s32.totalorder %s19, 1
      %s239 = scalar_select %p238, %s19, 1
      %s240 = scalar_lea.vmem %s3, %s239
      %s241 = smul.u32 2, %s20
      %p242 = scmp.lt.s32.totalorder %s19, 1
      %s243 = scalar_select %p242, %s19, 1
      %p244 = scmp.lt.s32.totalorder %s241, 1
      %s245 = scalar_select %p244, %s241, 1
      %s246 = smul.addr %s243, 2
      %s247 = sadd.s32 %s245, %s246
      %s248 = smul.addr %s247, 2
      %s249 = scalar_lea.vmem %s4, %s248
      %s250 = smul.u32 2, %s20
      %v252 = vld [vmem:[%s236] sm:$0xf]
      %v253 = vunpack.c.l.bf16 %v252
      %v254 = vld [vmem:[%s1] sm:$0xf]
      %v255 = vld [vmem:[%s1 + $0x4] sm:$0xf]
      %v256 = vld [vmem:[%s1 + $0x8] sm:$0xf]
      %v257 = vld [vmem:[%s1 + $0xc] sm:$0xf]
      %v258 = vunpack.c.l.bf16 %v254
      %v259 = vunpack.c.l.bf16 %v255
      %v260 = vunpack.c.l.bf16 %v256
      %v261 = vunpack.c.l.bf16 %v257
      %v262 = vld [vmem:[%s2] sm:$0xff]
      %v263 = vld [vmem:[%s2 + $0x8] sm:$0xff]
      %v264 = vld [vmem:[%s2 + $0x10] sm:$0xff]
      %v265 = vld [vmem:[%s2 + $0x18] sm:$0xff]
      %267 = vset.pattern.permute.xlu0 0
      %268 = vperm.xlu0 %267, %v258
      %v269 = vpop.permute.xlu0 %268
      %272 = vset.pattern.permute.xlu0 0
      %273 = vperm.xlu0 %272, %v259
      %v274 = vpop.permute.xlu0 %273
      %277 = vset.pattern.permute.xlu0 0
      %278 = vperm.xlu0 %277, %v260
      %v279 = vpop.permute.xlu0 %278
      %282 = vset.pattern.permute.xlu0 0
      %283 = vperm.xlu0 %282, %v261
      %v284 = vpop.permute.xlu0 %283
      %v287 = vlaneseq
      %v288 = vshrl.u32 %v287, 7
      %v289 = vsub.s32 0, %v288
      %v290 = vrot.slane %v253, %v289
      %v291 = vlaneseq
      %v292 = vshrl.u32 %v291, 7
      %v293 = vsub.s32 4, %v292
      %v294 = vrot.slane %v253, %v293
      %v297 = vlaneseq
      %v298 = vshrl.u32 %v297, 7
      %v299 = vsub.s32 0, %v298
      %v300 = vrot.slane %v290, %v299
      %v301 = vlaneseq
      %v302 = vshrl.u32 %v301, 7
      %v303 = vsub.s32 0, %v302
      %v304 = vrot.slane %v294, %v303
      %v305 = vmul.f32 %v269, %v300
      %v306 = vmul.f32 %v269, %v304
      %v307 = vmul.f32 %v274, %v300
      %v308 = vmul.f32 %v274, %v304
      %v309 = vmul.f32 %v279, %v300
      %v310 = vmul.f32 %v279, %v304
      %v311 = vmul.f32 %v284, %v300
      %v312 = vmul.f32 %v284, %v304
      %314 = vset.pattern.permute.xlu0 0
      %315 = vperm.xlu0 %314, %v262
      %v316 = vpop.permute.xlu0 %315
      %319 = vset.pattern.permute.xlu0 0
      %320 = vperm.xlu0 %319, %v263
      %v321 = vpop.permute.xlu0 %320
      %324 = vset.pattern.permute.xlu0 0
      %325 = vperm.xlu0 %324, %v264
      %v326 = vpop.permute.xlu0 %325
      %329 = vset.pattern.permute.xlu0 0
      %330 = vperm.xlu0 %329, %v265
      %v331 = vpop.permute.xlu0 %330
      %v333 = vadd.f32 %v316, %v305
      %v334 = vadd.f32 %v316, %v306
      %v335 = vadd.f32 %v321, %v307
      %v336 = vadd.f32 %v321, %v308
      %v337 = vadd.f32 %v326, %v309
      %v338 = vadd.f32 %v326, %v310
      %v339 = vadd.f32 %v331, %v311
      %v340 = vadd.f32 %v331, %v312
      %341 = vset.pattern.permute.xlu0 1
      %342 = vperm.xlu0 %341, %v258
      %v343 = vpop.permute.xlu0 %342
      %345 = vset.pattern.permute.xlu0 1
      %346 = vperm.xlu0 %345, %v259
      %v347 = vpop.permute.xlu0 %346
      %349 = vset.pattern.permute.xlu0 1
      %350 = vperm.xlu0 %349, %v260
      %v351 = vpop.permute.xlu0 %350
      %353 = vset.pattern.permute.xlu0 1
      %354 = vperm.xlu0 %353, %v261
      %v355 = vpop.permute.xlu0 %354
      %v357 = vlaneseq
      %v358 = vshrl.u32 %v357, 7
      %v359 = vsub.s32 1, %v358
      %v360 = vrot.slane %v253, %v359
      %v361 = vlaneseq
      %v362 = vshrl.u32 %v361, 7
      %v363 = vsub.s32 5, %v362
      %v364 = vrot.slane %v253, %v363
      %v367 = vlaneseq
      %v368 = vshrl.u32 %v367, 7
      %v369 = vsub.s32 1, %v368
      %v370 = vrot.slane %v360, %v369
      %v371 = vlaneseq
      %v372 = vshrl.u32 %v371, 7
      %v373 = vsub.s32 1, %v372
      %v374 = vrot.slane %v364, %v373
      %v375 = vmul.f32 %v343, %v370
      %v376 = vmul.f32 %v343, %v374
      %v377 = vmul.f32 %v347, %v370
      %v378 = vmul.f32 %v347, %v374
      %v379 = vmul.f32 %v351, %v370
      %v380 = vmul.f32 %v351, %v374
      %v381 = vmul.f32 %v355, %v370
      %v382 = vmul.f32 %v355, %v374
      %v383 = vadd.f32 %v333, %v375
      %v384 = vadd.f32 %v334, %v376
      %v385 = vadd.f32 %v335, %v377
      %v386 = vadd.f32 %v336, %v378
      %v387 = vadd.f32 %v337, %v379
      %v388 = vadd.f32 %v338, %v380
      %v389 = vadd.f32 %v339, %v381
      %v390 = vadd.f32 %v340, %v382
      %391 = vset.pattern.permute.xlu0 2
      %392 = vperm.xlu0 %391, %v258
      %v393 = vpop.permute.xlu0 %392
      %395 = vset.pattern.permute.xlu0 2
      %396 = vperm.xlu0 %395, %v259
      %v397 = vpop.permute.xlu0 %396
      %399 = vset.pattern.permute.xlu0 2
      %400 = vperm.xlu0 %399, %v260
      %v401 = vpop.permute.xlu0 %400
      %403 = vset.pattern.permute.xlu0 2
      %404 = vperm.xlu0 %403, %v261
      %v405 = vpop.permute.xlu0 %404
      %v407 = vlaneseq
      %v408 = vshrl.u32 %v407, 7
      %v409 = vsub.s32 2, %v408
      %v410 = vrot.slane %v253, %v409
      %v411 = vlaneseq
      %v412 = vshrl.u32 %v411, 7
      %v413 = vsub.s32 6, %v412
      %v414 = vrot.slane %v253, %v413
      %v417 = vlaneseq
      %v418 = vshrl.u32 %v417, 7
      %v419 = vsub.s32 2, %v418
      %v420 = vrot.slane %v410, %v419
      %v421 = vlaneseq
      %v422 = vshrl.u32 %v421, 7
      %v423 = vsub.s32 2, %v422
      %v424 = vrot.slane %v414, %v423
      %v425 = vmul.f32 %v393, %v420
      %v426 = vmul.f32 %v393, %v424
      %v427 = vmul.f32 %v397, %v420
      %v428 = vmul.f32 %v397, %v424
      %v429 = vmul.f32 %v401, %v420
      %v430 = vmul.f32 %v401, %v424
      %v431 = vmul.f32 %v405, %v420
      %v432 = vmul.f32 %v405, %v424
      %v433 = vadd.f32 %v383, %v425
      %v434 = vadd.f32 %v384, %v426
      %v435 = vadd.f32 %v385, %v427
      %v436 = vadd.f32 %v386, %v428
      %v437 = vadd.f32 %v387, %v429
      %v438 = vadd.f32 %v388, %v430
      %v439 = vadd.f32 %v389, %v431
      %v440 = vadd.f32 %v390, %v432
      %v441 = vmul.f32 %v433, %v433
      %v442 = vmul.f32 %v434, %v434
      %v443 = vmul.f32 %v435, %v435
      %v444 = vmul.f32 %v436, %v436
      %v445 = vmul.f32 %v437, %v437
      %v446 = vmul.f32 %v438, %v438
      %v447 = vmul.f32 %v439, %v439
      %v448 = vmul.f32 %v440, %v440
      %v449 = vadd.f32 %v441, %v443
      %v450 = vadd.f32 %v449, %v445
      %v451 = vadd.f32 %v450, %v447
      %v452 = vrot.slane %v451, 4
      %v453 = vadd.f32 %v451, %v452
      %v454 = vrot.slane %v453, 2
      %v455 = vadd.f32 %v453, %v454
      %v456 = vrot.slane %v455, 1
      %v457 = vadd.f32 %v455, %v456
      %v458 = vadd.f32 %v442, %v444
      %v459 = vadd.f32 %v458, %v446
      %v460 = vadd.f32 %v459, %v448
      %v461 = vrot.slane %v460, 4
      %v462 = vadd.f32 %v460, %v461
      %v463 = vrot.slane %v462, 2
      %v464 = vadd.f32 %v462, %v463
      %v465 = vrot.slane %v464, 1
      %v466 = vadd.f32 %v464, %v465
      %v467 = vadd.f32 %v457, 1e-12
      %v468 = vadd.f32 %v466, 1e-12
      %v469 = vrsqrt.pop %v467
      %v470 = vrsqrt.pop %v468
      %v471 = vld [vmem:[%s240] sm:$0x1]
      %v472 = vpack.c.bf16 %v435, %v433
      %v473 = vpack.c.bf16 %v436, %v434
      %v474 = vpack.c.bf16 %v439, %v437
      %v475 = vpack.c.bf16 %v440, %v438
      %vm476 = vcmask 261120
      %v478 = vsel %vm476, %v471, 0
      %480 = vmatprep.subr.bf16.mxu0 %v473
      %481 = vmatpush1.bf16.msra.mxu0 %v472
      %482 = vmatprep.subr.bf16.mxu0 %v475
      %483 = vmatpush1.bf16.msra.mxu0 %v474
      %484 = vmatprep.subr.bf16.mxu0 0
      %485 = vmatpush1.bf16.msra.mxu0 0
      %486 = vmatprep.subr.bf16.mxu0 0
      %487 = vmatpush1.bf16.msra.mxu0 0
      %488 = vmatprep.subr.bf16.mxu0 0
      %489 = vmatpush1.bf16.msra.mxu0 0
      %490 = vmatprep.subr.bf16.mxu0 0
      %491 = vmatpush1.bf16.msra.mxu0 0
      %492 = vmatprep.subr.bf16.mxu0 0
      %493 = vmatpush1.bf16.msra.mxu0 0
      %494 = vmatprep.subr.bf16.mxu0 0
      %495 = vmatpush1.bf16.msra.mxu0 0
      %496 = vmatprep.subr.bf16.mxu0 0
      %497 = vmatpush1.bf16.msra.mxu0 0
      %498 = vmatprep.subr.bf16.mxu0 0
      %499 = vmatpush1.bf16.msra.mxu0 0
      %500 = vmatprep.subr.bf16.mxu0 0
      %501 = vmatpush1.bf16.msra.mxu0 0
      %502 = vmatprep.subr.bf16.mxu0 0
      %503 = vmatpush1.bf16.msra.mxu0 0
      %504 = vmatprep.subr.bf16.mxu0 0
      %505 = vmatpush1.bf16.msra.mxu0 0
      %506 = vmatprep.subr.bf16.mxu0 0
      %507 = vmatpush1.bf16.msra.mxu0 0
      %508 = vmatprep.subr.bf16.mxu0 0
      %509 = vmatpush1.bf16.msra.mxu0 0
      %510 = vmatprep.subr.bf16.mxu0 0
      %511 = vmatpush1.bf16.msra.mxu0 0
      %512 = vmatprep.mubr.bf16.mxu0 0
      %513 = vmatmul.mubr.bf16.gmra.mrb[0].mxu0 %v478
      %v514 = vpop.f32.mrb[0].mxu0
      %v515 = vadd.f32 0.0, %v514
      %v516 = vpop.f32.mrb[0].mxu0
      %v517 = vadd.f32 0.0, %v516
      %v518 = vpop.f32.mrb[0].mxu0
      %v519 = vpop.f32.mrb[0].mxu0
      %520 = vdwg.mxu0
      %v521 = vmul.f32 %v515, %v469
      %v522 = vmul.f32 %v517, %v470
      %v525 = vcombine.low %v521, %v522
      %v527 = vunpack.c.l.s4 1983009808
      %v528 = vunpack.c.0.s8 %v527
      %v529 = vlaneseq
      %v530 = vshrl.u32 %v529, 7
      %v531 = vsub.s32 %v528, %v530
      %v532 = vrot.slane %v525, %v531
      %534 = vst [vmem:[%s249] sm:$0xf] %v532
      %s535 = smul.u32 2, %s20
      %p536 = scmp.lt.s32.totalorder %s19, 1
      %s537 = scalar_select %p536, %s19, 1
      %p538 = scmp.lt.s32.totalorder %s535, 1
      %s539 = scalar_select %p538, %s535, 1
      %s540 = smul.addr %s537, 2
      %s541 = sadd.s32 %s539, %s540
      %s542 = smul.addr %s541, 2
      %s543 = scalar_lea.vmem %s4, %s542
      // Predicated region
      $region37: #{text_driven_segmentation.1} parent=35 // pred_check
        %p544 = pneg %p143
      $region38: #{text_driven_segmentation.1} parent=35 // pred_check_branch
        %546 = sbr.rel (%p544) target = $region40
      $region39: #{text_driven_segmentation.1} parent=35 // pred_region
        %s547 = smul.u32 2, %s20
      $region40: #{text_driven_segmentation.1} parent=35 // pred_fallthru
        _
    $region36: #{text_driven_segmentation.1} parent=5 // pred_fallthru
      _
    %p548 = scmp.le.s32.totalorder 2, %s10
    // Predicated region
    $region41: #{text_driven_segmentation.1} parent=5 // pred_check
      %p549 = pneg %p548
    $region42: #{text_driven_segmentation.1} parent=5 // pred_check_branch
      %551 = sbr.rel (%p549) target = $region44
    $region43: #{text_driven_segmentation.1} parent=5 // pred_region
      %s552 = ssub.s32 %s10, 2
      // Predicated region
      $region45: #{text_driven_segmentation.1} parent=43 // pred_check
        %p553 = pneg %p149
      $region46: #{text_driven_segmentation.1} parent=43 // pred_check_branch
        %555 = sbr.rel (%p553) target = $region48
      $region47: #{text_driven_segmentation.1} parent=43 // pred_region
        %s556 = smul.u32 2, %s22
        %p557 = scmp.lt.s32.totalorder %s21, 1
        %s558 = scalar_select %p557, %s21, 1
        %p559 = scmp.lt.s32.totalorder %s556, 1
        %s560 = scalar_select %p559, %s556, 1
        %s561 = smul.addr %s558, 2
        %s562 = sadd.s32 %s560, %s561
        %s563 = smul.addr %s562, 2
        %s564 = scalar_lea.vmem %s4, %s563
      $region48: #{text_driven_segmentation.1} parent=43 // pred_fallthru
        _
    $region44: #{text_driven_segmentation.1} parent=5 // pred_fallthru
      _
  $region6: #{text_driven_segmentation.1} parent=0 // loop_footer
    %s14 = sadd.s32 1, %s10
  $region7: #{text_driven_segmentation.1} parent=0 // loop_footer_branch
    %9 = sbr.rel target = $region3
  $region8: #{text_driven_segmentation.1} parent=0 // loop_exit
    _

</llo_original>
